<compile_context>
chip_gen: v6e
topology: v6e:2x2x1
jax: 0.10.0
libtpu: 0.0.40
codegen_flags: <defaults>
</compile_context>

<pallas_src>
import math
import numpy as np
import jax
import jax.numpy as jnp
from jax import lax
from jax.experimental import pallas as pl
from jax.experimental.pallas import tpu as pltpu


# ---------------------------------------------------------------------------
# Parameter construction (deterministic, mirrors PyTorch build_kernel exactly)
# ---------------------------------------------------------------------------
def build_gaussian_kernel(size, sigma):
    """2-D kernel exactly as the PyTorch module builds it (for the reference)."""
    rng = list(range(-size // 2 + 1, size // 2 + 1))
    k = np.array(
        [
            [
                1.0 / (2.0 * math.pi * sigma ** 2)
                * math.exp(-(x ** 2 + y ** 2) / (2.0 * sigma ** 2))
                for x in rng
            ]
            for y in rng
        ],
        dtype=np.float32,
    )
    return k / k.sum()


def gauss_taps_1d(size, sigma):
    """Normalized 1-D taps; the torch 2-D kernel factors exactly as g (outer) g."""
    r = size // 2
    g = np.array(
        [math.exp(-(i * i) / (2.0 * sigma * sigma)) for i in range(-r, r + 1)],
        dtype=np.float64,
    )
    g = g / g.sum()
    return [float(v) for v in g]


# ---------------------------------------------------------------------------
# Pallas kernel: separable depthwise multi-scale Gaussian, halo handled in VMEM
# ---------------------------------------------------------------------------
def _make_msg_kernel(sizes, g_taps, R, CT, H, W):
    S = len(sizes)
    inv_S = 1.0 / float(S)
    Hp = H + 2 * R
    Wp = W + 2 * R

    def kernel(x_ref, o_ref, xpad_ref, vpad_ref):
        # x_ref:    (CT, H, W)   input block (VMEM, auto-pipelined)
        # o_ref:    (CT, H, W)   output block
        # xpad_ref: (CT, Hp, Wp) zero-padded input (halo built in VMEM)
        # vpad_ref: (CT, H,  Wp) vertically blurred intermediate (halo cols = 0)

        # Zero ONLY the four halo strips (per-step; not program_id gated so
        # megacore sharding stays correct), then write the interior.
        if R > 0:
            xpad_ref[:, :R, :] = jnp.zeros((CT, R, Wp), jnp.float32)
            xpad_ref[:, R + H:, :] = jnp.zeros((CT, R, Wp), jnp.float32)
            xpad_ref[:, R:R + H, :R] = jnp.zeros((CT, H, R), jnp.float32)
            xpad_ref[:, R:R + H, R + W:] = jnp.zeros((CT, H, R), jnp.float32)
        xpad_ref[:, R:R + H, R:R + W] = x_ref[...].astype(jnp.float32)

        # TODO(synk): for planes with min(H, W) >= 128 both 1-D passes should be
        # reformulated as banded-matrix matmuls (Bv_s: HxH, Bh_s: WxW f32
        # constants, inv_S folded into Bh_s) so the MACs run on the MXU and all
        # lane-unaligned horizontal slices disappear; deferred because the MXU
        # only pays off at >=128-wide tiles and the f32 MXU path needs the
        # 5e-5 tolerance re-validated.
        acc = None
        for size, g in zip(sizes, g_taps):          # static unroll over scales
            r = size // 2
            base = R - r
            mid = r                                 # center tap index

            # --- vertical 1-D pass: full-width (lane-aligned) sublane-shifted
            #     slices; symmetric taps paired (one mul per pair). ---
            v = g[mid] * xpad_ref[:, base + mid:base + mid + H, :]
            for t in range(r):
                lo = base + t
                hi = base + (size - 1 - t)
                v = v + g[t] * (xpad_ref[:, lo:lo + H, :]
                                + xpad_ref[:, hi:hi + H, :])

            # Halo columns of v are zero (blur of zeroed columns), so a single
            # full store yields a horizontally padded buffer for pass two.
            vpad_ref[...] = v

            # --- horizontal 1-D pass: symmetric taps paired, 1/num_scales
            #     folded into the taps, accumulated straight into acc. ---
            # TODO(synk): for W >= 128 replace the lane-offset slices below with
            # pltpu.roll on a lane-aligned buffer (XLU slot) or the MXU path.
            gs = [gt * inv_S for gt in g]
            term = gs[mid] * vpad_ref[:, :, base + mid:base + mid + W]
            acc = term if acc is None else acc + term
            for t in range(r):
                lo = base + t
                hi = base + (size - 1 - t)
                acc = acc + gs[t] * (vpad_ref[:, :, lo:lo + W]
                                     + vpad_ref[:, :, hi:hi + W])

        o_ref[...] = acc.astype(o_ref.dtype)

    return kernel


# ---------------------------------------------------------------------------
# Generation-aware tiling / VMEM budgeting
# ---------------------------------------------------------------------------
def _tpu_vmem_capacity_bytes(default_bytes=64 << 20):
    try:
        cap = getattr(pltpu.get_tpu_info(), "vmem_capacity_bytes", None)
        if cap:
            return int(cap)
    except Exception:
        pass
    return default_bytes


def _choose_tiling(N, C, H, W, R):
    """Channel tile + vmem limit.  Big blocks on v5e/v6e (128 MiB VMEM);
    tighter budget on v7x (64 MiB) plus >= 2 grid blocks per TensorCore."""
    Hp, Wp = H + 2 * R, W + 2 * R
    cap = _tpu_vmem_capacity_bytes()
    if cap > (64 << 20):                  # v5e / v6e: 128 MiB physical, 1 TC
        budget, limit, num_tc = 64 << 20, 96 << 20, 1
    else:                                 # v7x (or unknown -> conservative)
        budget, limit, num_tc = 20 << 20, 44 << 20, 2

    # Per-channel footprint incl. compiler-materialized value temporaries.
    per_c = 4 * (
        2 * 2 * H * W          # input + output blocks, double-buffered
        + Hp * Wp              # xpad scratch
        + H * Wp               # vpad scratch
        + 2 * H * Wp           # vertical-pass value temporaries
        + 2 * H * W            # acc + horizontal-pass slice copies
    )
    ct = max(1, min(C, budget // max(per_c, 1)))
    while C % ct:
        ct -= 1

    # Keep >= 2 blocks per TensorCore along the "parallel" axes (v7x megacore).
    while ct > 1 and N * (C // ct) < 2 * num_tc:
        ct -= 1
        while C % ct:
            ct -= 1
    return ct, limit


def multi_scale_gaussian(x, sizes, sigmas):
    """x: (N, C, H, W) -> (N, C, H, W); mean of depthwise Gaussian blurs."""
    N, C, H, W = x.shape
    sizes = tuple(int(s) for s in sizes)
    if any(s % 2 == 0 for s in sizes):
        raise ValueError("Only odd Gaussian sizes are supported (exact 'same' padding).")

    R = max(sizes) // 2
    g_taps = [gauss_taps_1d(s, sg) for s, sg in zip(sizes, sigmas)]
    CT, vmem_limit = _choose_tiling(N, C, H, W, R)

    kernel = _make_msg_kernel(sizes, g_taps, R, CT, H, W)

    return pl.pallas_call(
        kernel,
        out_shape=jax.ShapeDtypeStruct((N, C, H, W), x.dtype),
        grid=(N, C // CT),
        in_specs=[
            pl.BlockSpec((pl.Squeezed(), CT, H, W), lambda n, c: (n, c, 0, 0)),
        ],
        out_specs=pl.BlockSpec((pl.Squeezed(), CT, H, W), lambda n, c: (n, c, 0, 0)),
        scratch_shapes=[
            pltpu.VMEM((CT, H + 2 * R, W + 2 * R), jnp.float32),
            pltpu.VMEM((CT, H, W + 2 * R), jnp.float32),
        ],
        compiler_params=pltpu.CompilerParams(
            dimension_semantics=("parallel", "parallel"),
            vmem_limit_bytes=vmem_limit,
        ),
    )(x)


# ---------------------------------------------------------------------------
# Pure-JAX reference (matches PyTorch forward semantics)
# ---------------------------------------------------------------------------
def reference_forward(x, sizes, sigmas):
    N, C, H, W = x.shape
    outs = []
    for s, sg in zip(sizes, sigmas):
        k = jnp.asarray(build_gaussian_kernel(s, sg))
        w = jnp.broadcast_to(k[None, None, :, :], (C, 1, s, s))
        o = lax.conv_general_dilated(
            x, w, window_strides=(1, 1),
            padding=[(s // 2, s // 2), (s // 2, s // 2)],
            dimension_numbers=("NCHW", "OIHW", "NCHW"),
            feature_group_count=C,
            precision=lax.Precision.HIGHEST,
        )
        outs.append(o)
    return sum(outs) / float(len(outs))


if __name__ == "__main__":
    sizes = (3, 5)
    sigmas = (1.0, 2.0)
    dim = 4  # channels

    key = jax.random.PRNGKey(0)
    x = jax.random.normal(key, (2, dim, 16, 16), dtype=jnp.float32)

    out = jax.block_until_ready(multi_scale_gaussian(x, sizes, sigmas))
    ref = jax.block_until_ready(reference_forward(x, sizes, sigmas))

    assert out.shape == ref.shape == (2, dim, 16, 16)
    err = float(jnp.max(jnp.abs(out - ref)))
    assert err < 5e-5, f"mismatch vs reference: {err}"

    print("KERNEL_OK")
</pallas_src>

<mosaic_0001>
module attributes {stable_mosaic.version = 11 : i64} {
  func.func @kernel(%arg0: i32, %arg1: i32, %arg2: memref<1x2x16x16xf32, #tpu.memory_space<vmem>>, %arg3: memref<1x2x16x16xf32, #tpu.memory_space<vmem>>, %arg4: memref<2x20x20xf32, #tpu.memory_space<vmem>>, %arg5: memref<2x16x20xf32, #tpu.memory_space<vmem>>) attributes {dimension_semantics = [#tpu.dimension_semantics<parallel>, #tpu.dimension_semantics<parallel>], iteration_bounds = array<i64: 2, 2>, scalar_prefetch = 0 : i64, scratch_operands = 2 : i64, tpu.core_type = #tpu.core_type<tc>, window_params = [{transform_indices = @transform_0, window_bounds = array<i64: 1, 2, 16, 16>}, {transform_indices = @transform_1, window_bounds = array<i64: 1, 2, 16, 16>}]} {
    %cst = arith.constant 0.000000e+00 : f32
    %0 = vector.broadcast %cst : f32 to vector<2x2x20xf32>
    %c0 = arith.constant 0 : index
    %c0_0 = arith.constant 0 : index
    %c0_1 = arith.constant 0 : index
    %1 = vector.load %arg4[%c0, %c0_0, %c0_1] : memref<2x20x20xf32, #tpu.memory_space<vmem>>, vector<2x2x20xf32>
    tpu.vector_store %arg4[%c0, %c0_0, %c0_1], %0 {strides = array<i32>} : memref<2x20x20xf32, #tpu.memory_space<vmem>>, vector<2x2x20xf32>,
    %cst_2 = arith.constant 0.000000e+00 : f32
    %2 = vector.broadcast %cst_2 : f32 to vector<2x2x20xf32>
    %c0_3 = arith.constant 0 : index
    %c18 = arith.constant 18 : index
    %c0_4 = arith.constant 0 : index
    %3 = vector.load %arg4[%c0_3, %c18, %c0_4] : memref<2x20x20xf32, #tpu.memory_space<vmem>>, vector<2x2x20xf32>
    tpu.vector_store %arg4[%c0_3, %c18, %c0_4], %2 {strides = array<i32>} : memref<2x20x20xf32, #tpu.memory_space<vmem>>, vector<2x2x20xf32>,
    %cst_5 = arith.constant 0.000000e+00 : f32
    %4 = vector.broadcast %cst_5 : f32 to vector<2x16x2xf32>
    %c0_6 = arith.constant 0 : index
    %c2 = arith.constant 2 : index
    %c0_7 = arith.constant 0 : index
    %5 = vector.load %arg4[%c0_6, %c2, %c0_7] : memref<2x20x20xf32, #tpu.memory_space<vmem>>, vector<2x16x2xf32>
    tpu.vector_store %arg4[%c0_6, %c2, %c0_7], %4 {strides = array<i32>} : memref<2x20x20xf32, #tpu.memory_space<vmem>>, vector<2x16x2xf32>,
    %cst_8 = arith.constant 0.000000e+00 : f32
    %6 = vector.broadcast %cst_8 : f32 to vector<2x16x2xf32>
    %c0_9 = arith.constant 0 : index
    %c2_10 = arith.constant 2 : index
    %c18_11 = arith.constant 18 : index
    %7 = vector.load %arg4[%c0_9, %c2_10, %c18_11] : memref<2x20x20xf32, #tpu.memory_space<vmem>>, vector<2x16x2xf32>
    tpu.vector_store %arg4[%c0_9, %c2_10, %c18_11], %6 {strides = array<i32>} : memref<2x20x20xf32, #tpu.memory_space<vmem>>, vector<2x16x2xf32>,
    %c0_12 = arith.constant 0 : index
    %c0_13 = arith.constant 0 : index
    %c0_14 = arith.constant 0 : index
    %c0_15 = arith.constant 0 : index
    %8 = vector.load %arg2[%c0_12, %c0_13, %c0_14, %c0_15] : memref<1x2x16x16xf32, #tpu.memory_space<vmem>>, vector<1x2x16x16xf32>
    %9 = vector.shape_cast %8 : vector<1x2x16x16xf32> to vector<2x16x16xf32>
    %c0_16 = arith.constant 0 : index
    %c2_17 = arith.constant 2 : index
    %c2_18 = arith.constant 2 : index
    %10 = vector.load %arg4[%c0_16, %c2_17, %c2_18] : memref<2x20x20xf32, #tpu.memory_space<vmem>>, vector<2x16x16xf32>
    tpu.vector_store %arg4[%c0_16, %c2_17, %c2_18], %9 {strides = array<i32>} : memref<2x20x20xf32, #tpu.memory_space<vmem>>, vector<2x16x16xf32>,
    %c0_19 = arith.constant 0 : index
    %c2_20 = arith.constant 2 : index
    %c0_21 = arith.constant 0 : index
    %11 = vector.load %arg4[%c0_19, %c2_20, %c0_21] : memref<2x20x20xf32, #tpu.memory_space<vmem>>, vector<2x16x20xf32>
    %cst_22 = arith.constant 0.451862752 : f32
    %12 = vector.broadcast %cst_22 : f32 to vector<2x16x20xf32>
    %13 = arith.mulf %12, %11 : vector<2x16x20xf32>
    %c0_23 = arith.constant 0 : index
    %c1 = arith.constant 1 : index
    %c0_24 = arith.constant 0 : index
    %14 = vector.load %arg4[%c0_23, %c1, %c0_24] : memref<2x20x20xf32, #tpu.memory_space<vmem>>, vector<2x16x20xf32>
    %c0_25 = arith.constant 0 : index
    %c3 = arith.constant 3 : index
    %c0_26 = arith.constant 0 : index
    %15 = vector.load %arg4[%c0_25, %c3, %c0_26] : memref<2x20x20xf32, #tpu.memory_space<vmem>>, vector<2x16x20xf32>
    %16 = arith.addf %14, %15 : vector<2x16x20xf32>
    %cst_27 = arith.constant 0.274068624 : f32
    %17 = vector.broadcast %cst_27 : f32 to vector<2x16x20xf32>
    %18 = arith.mulf %17, %16 : vector<2x16x20xf32>
    %19 = arith.addf %13, %18 : vector<2x16x20xf32>
    %c0_28 = arith.constant 0 : index
    %c0_29 = arith.constant 0 : index
    %c0_30 = arith.constant 0 : index
    %20 = vector.load %arg5[%c0_28, %c0_29, %c0_30] : memref<2x16x20xf32, #tpu.memory_space<vmem>>, vector<2x16x20xf32>
    tpu.vector_store %arg5[%c0_28, %c0_29, %c0_30], %19 {strides = array<i32>} : memref<2x16x20xf32, #tpu.memory_space<vmem>>, vector<2x16x20xf32>,
    %c0_31 = arith.constant 0 : index
    %c0_32 = arith.constant 0 : index
    %c2_33 = arith.constant 2 : index
    %21 = vector.load %arg5[%c0_31, %c0_32, %c2_33] : memref<2x16x20xf32, #tpu.memory_space<vmem>>, vector<2x16x16xf32>
    %cst_34 = arith.constant 0.225931376 : f32
    %22 = vector.broadcast %cst_34 : f32 to vector<2x16x16xf32>
    %23 = arith.mulf %22, %21 : vector<2x16x16xf32>
    %c0_35 = arith.constant 0 : index
    %c0_36 = arith.constant 0 : index
    %c1_37 = arith.constant 1 : index
    %24 = vector.load %arg5[%c0_35, %c0_36, %c1_37] : memref<2x16x20xf32, #tpu.memory_space<vmem>>, vector<2x16x16xf32>
    %c0_38 = arith.constant 0 : index
    %c0_39 = arith.constant 0 : index
    %c3_40 = arith.constant 3 : index
    %25 = vector.load %arg5[%c0_38, %c0_39, %c3_40] : memref<2x16x20xf32, #tpu.memory_space<vmem>>, vector<2x16x16xf32>
    %26 = arith.addf %24, %25 : vector<2x16x16xf32>
    %cst_41 = arith.constant 0.137034312 : f32
    %27 = vector.broadcast %cst_41 : f32 to vector<2x16x16xf32>
    %28 = arith.mulf %27, %26 : vector<2x16x16xf32>
    %29 = arith.addf %23, %28 : vector<2x16x16xf32>
    %c0_42 = arith.constant 0 : index
    %c2_43 = arith.constant 2 : index
    %c0_44 = arith.constant 0 : index
    %30 = vector.load %arg4[%c0_42, %c2_43, %c0_44] : memref<2x20x20xf32, #tpu.memory_space<vmem>>, vector<2x16x20xf32>
    %cst_45 = arith.constant 0.251379132 : f32
    %31 = vector.broadcast %cst_45 : f32 to vector<2x16x20xf32>
    %32 = arith.mulf %31, %30 : vector<2x16x20xf32>
    %c0_46 = arith.constant 0 : index
    %c0_47 = arith.constant 0 : index
    %c0_48 = arith.constant 0 : index
    %33 = vector.load %arg4[%c0_46, %c0_47, %c0_48] : memref<2x20x20xf32, #tpu.memory_space<vmem>>, vector<2x16x20xf32>
    %c0_49 = arith.constant 0 : index
    %c4 = arith.constant 4 : index
    %c0_50 = arith.constant 0 : index
    %34 = vector.load %arg4[%c0_49, %c4, %c0_50] : memref<2x20x20xf32, #tpu.memory_space<vmem>>, vector<2x16x20xf32>
    %35 = arith.addf %33, %34 : vector<2x16x20xf32>
    %cst_51 = arith.constant 0.152469143 : f32
    %36 = vector.broadcast %cst_51 : f32 to vector<2x16x20xf32>
    %37 = arith.mulf %36, %35 : vector<2x16x20xf32>
    %38 = arith.addf %32, %37 : vector<2x16x20xf32>
    %c0_52 = arith.constant 0 : index
    %c1_53 = arith.constant 1 : index
    %c0_54 = arith.constant 0 : index
    %39 = vector.load %arg4[%c0_52, %c1_53, %c0_54] : memref<2x20x20xf32, #tpu.memory_space<vmem>>, vector<2x16x20xf32>
    %c0_55 = arith.constant 0 : index
    %c3_56 = arith.constant 3 : index
    %c0_57 = arith.constant 0 : index
    %40 = vector.load %arg4[%c0_55, %c3_56, %c0_57] : memref<2x20x20xf32, #tpu.memory_space<vmem>>, vector<2x16x20xf32>
    %41 = arith.addf %39, %40 : vector<2x16x20xf32>
    %cst_58 = arith.constant 0.221841291 : f32
    %42 = vector.broadcast %cst_58 : f32 to vector<2x16x20xf32>
    %43 = arith.mulf %42, %41 : vector<2x16x20xf32>
    %44 = arith.addf %38, %43 : vector<2x16x20xf32>
    %c0_59 = arith.constant 0 : index
    %c0_60 = arith.constant 0 : index
    %c0_61 = arith.constant 0 : index
    %45 = vector.load %arg5[%c0_59, %c0_60, %c0_61] : memref<2x16x20xf32, #tpu.memory_space<vmem>>, vector<2x16x20xf32>
    tpu.vector_store %arg5[%c0_59, %c0_60, %c0_61], %44 {strides = array<i32>} : memref<2x16x20xf32, #tpu.memory_space<vmem>>, vector<2x16x20xf32>,
    %c0_62 = arith.constant 0 : index
    %c0_63 = arith.constant 0 : index
    %c2_64 = arith.constant 2 : index
    %46 = vector.load %arg5[%c0_62, %c0_63, %c2_64] : memref<2x16x20xf32, #tpu.memory_space<vmem>>, vector<2x16x16xf32>
    %cst_65 = arith.constant 0.125689566 : f32
    %47 = vector.broadcast %cst_65 : f32 to vector<2x16x16xf32>
    %48 = arith.mulf %47, %46 : vector<2x16x16xf32>
    %49 = arith.addf %29, %48 : vector<2x16x16xf32>
    %c0_66 = arith.constant 0 : index
    %c0_67 = arith.constant 0 : index
    %c0_68 = arith.constant 0 : index
    %50 = vector.load %arg5[%c0_66, %c0_67, %c0_68] : memref<2x16x20xf32, #tpu.memory_space<vmem>>, vector<2x16x16xf32>
    %c0_69 = arith.constant 0 : index
    %c0_70 = arith.constant 0 : index
    %c4_71 = arith.constant 4 : index
    %51 = vector.load %arg5[%c0_69, %c0_70, %c4_71] : memref<2x16x20xf32, #tpu.memory_space<vmem>>, vector<2x16x16xf32>
    %52 = arith.addf %50, %51 : vector<2x16x16xf32>
    %cst_72 = arith.constant 0.0762345716 : f32
    %53 = vector.broadcast %cst_72 : f32 to vector<2x16x16xf32>
    %54 = arith.mulf %53, %52 : vector<2x16x16xf32>
    %55 = arith.addf %49, %54 : vector<2x16x16xf32>
    %c0_73 = arith.constant 0 : index
    %c0_74 = arith.constant 0 : index
    %c1_75 = arith.constant 1 : index
    %56 = vector.load %arg5[%c0_73, %c0_74, %c1_75] : memref<2x16x20xf32, #tpu.memory_space<vmem>>, vector<2x16x16xf32>
    %c0_76 = arith.constant 0 : index
    %c0_77 = arith.constant 0 : index
    %c3_78 = arith.constant 3 : index
    %57 = vector.load %arg5[%c0_76, %c0_77, %c3_78] : memref<2x16x20xf32, #tpu.memory_space<vmem>>, vector<2x16x16xf32>
    %58 = arith.addf %56, %57 : vector<2x16x16xf32>
    %cst_79 = arith.constant 0.110920645 : f32
    %59 = vector.broadcast %cst_79 : f32 to vector<2x16x16xf32>
    %60 = arith.mulf %59, %58 : vector<2x16x16xf32>
    %61 = arith.addf %55, %60 : vector<2x16x16xf32>
    %c0_80 = arith.constant 0 : index
    %c0_81 = arith.constant 0 : index
    %c0_82 = arith.constant 0 : index
    %c0_83 = arith.constant 0 : index
    %62 = vector.load %arg3[%c0_80, %c0_81, %c0_82, %c0_83] : memref<1x2x16x16xf32, #tpu.memory_space<vmem>>, vector<1x2x16x16xf32>
    %63 = vector.shape_cast %62 : vector<1x2x16x16xf32> to vector<2x16x16xf32>
    %64 = vector.shape_cast %61 : vector<2x16x16xf32> to vector<1x2x16x16xf32>
    tpu.vector_store %arg3[%c0_80, %c0_81, %c0_82, %c0_83], %64 {strides = array<i32>} : memref<1x2x16x16xf32, #tpu.memory_space<vmem>>, vector<1x2x16x16xf32>,
    return
  }
  func.func @transform_0(%arg0: i32, %arg1: i32) -> (i32, i32, i32, i32) {
    %c0_i32 = arith.constant 0 : i32
    %c0_i32_0 = arith.constant 0 : i32
    %c0_i32_1 = arith.constant 0 : i32
    return %arg0, %arg1, %c0_i32, %c0_i32_0 : i32, i32, i32, i32
  }
  func.func @transform_1(%arg0: i32, %arg1: i32) -> (i32, i32, i32, i32) {
    %c0_i32 = arith.constant 0 : i32
    %c0_i32_0 = arith.constant 0 : i32
    %c0_i32_1 = arith.constant 0 : i32
    return %arg0, %arg1, %c0_i32, %c0_i32_0 : i32, i32, i32, i32
  }
}

</mosaic_0001>

<llo_original>
// kernel: tpu_custom_call.1
$region0: #{tpu_custom_call.1}
  #allocation0 [shape = 'u32[]', space=smem, size = 0x4, offset = 0x4, fixed_abs, tag = 'smem constant byte address 0x4 - core index']
  #allocation1 [shape = 'u32[144,128]{1,0:T(1,128)}', space=vmem, size = 0x12000, scoped, tag = 'internal scratch']
  #allocation2 [shape = 'f32[2,20,20]{2,1,0:T(8,128)}', space=vmem, size = 0x6000, scoped, tag = 'scratch operand']
  #allocation3 [shape = 'f32[2,16,20]{2,1,0:T(8,128)}', space=vmem, size = 0x4000, scoped, tag = 'scratch operand']
  %s0 = inlined_call_operand.hbm [shape: f32[2,4,16,16], index: 0, kind: input, shape index: {}]
  %s1 = inlined_call_operand.hbm [shape: f32[2,4,16,16], index: 1, kind: output, shape index: {}]
  %s2 = sld [smem:[#allocation0]]
  $region41: #{tpu_custom_call.1} parent=0
    _
  %s4 = ssub.s32 1, %s2
  %s5 = scalar_select 0, %s4, %s2
  $region1: #{tpu_custom_call.1} parent=0
    #allocation4 [shape = 'u8[32768]{0}', space=vmem, size = 0x8000, scoped, tag = 'input window, operand 0']
    #allocation5 [shape = 's32[2]{0}', space=sflag, size = 0x8, scoped, tag = 'scoped memory for tpu_custom_call.1']
    #allocation6 [shape = 's32[2]{0}', space=sflag, size = 0x8, scoped, tag = 'scoped memory for tpu_custom_call.1']
    #allocation7 [shape = 'u8[32768]{0}', space=vmem, size = 0x8000, scoped, tag = 'output window, operand 0']
    %6 = vsyncpa [#allocation5], 0
    %s7 = scalar_lea.sflag [#allocation5], 1
    %8 = vsyncpa %s7, 0
    %9 = vsyncpa [#allocation6], 0
    %s10 = scalar_lea.sflag [#allocation6], 1
    %11 = vsyncpa %s10, 0
    loop: start=0, step=1, limit=6
    $region2: #{tpu_custom_call.1} parent=1 // loop_pre_header
      _
    $region3: #{tpu_custom_call.1} parent=1 // loop_header
      %s13 = sphi 0, %s17
      %p14 = scmp.ge.s32.totalorder %s13, 6
      %s20 = sphi 0, %s32
      %s21 = sphi 0, %s28
      %s22 = sphi 0, %s20
      %s23 = sphi 0, %s21
      %s24 = sphi 0, %s22
      %s25 = sphi 0, %s23
      %s37 = sphi 0, %s39
      %s40 = sphi 0, %s37
      %s41 = sphi 0, %s40
      %s57 = sphi 0, %s41
      %s65 = sphi 0, %s67
      %s68 = sphi 0, %s65
      %s69 = sphi 0, %s68
      %s85 = sphi 0, %s69
    $region4: #{tpu_custom_call.1} parent=1 // loop_header_branch
      %16 = sbr.rel (%p14) target = $region8
    $region5: #{tpu_custom_call.1} parent=1 // loop_body
      %s18 = ssub.s32 %s13, 1
      %s19 = ssub.s32 %s13, 2
      %s26 = sadd.s32 1, %s21
      %p27 = scmp.ge.s32.totalorder %s26, 2
      %s28 = scalar_select %p27, 0, %s26
      %s29 = sadd.s32 1, %s20
      %s30 = scalar_select %p27, %s29, %s20
      %p31 = scmp.ge.s32.totalorder %s30, 2
      %s32 = scalar_select %p31, 0, %s30
      %s33 = ssub.s32 %s20, %s32
      %s34 = ssub.s32 %s21, %s28
      %s35 = sor.u32 %s33, %s34
      %p36 = scmp.eq.s32.totalorder %s35, 0
      %s38 = sadd.s32 %s37, 1
      %s39 = scalar_select %p36, %s37, %s38
      %p42 = pneg %p36
      %p43 = scmp.eq.s32.totalorder %s13, 3
      %p44 = por %p42, %p43
      %p45 = scmp.ne.s32.totalorder %s37, %s40
      %p46 = scmp.eq.s32.totalorder %s13, 0
      %p47 = por %p45, %p46
      %p48 = scmp.ne.s32.totalorder %s37, %s40
      %p49 = scmp.eq.s32.totalorder %s18, 3
      %p50 = por %p48, %p49
      %p51 = scmp.ne.s32.totalorder %s40, %s41
      %p52 = scmp.eq.s32.totalorder %s18, 0
      %p53 = por %p51, %p52
      %p54 = scmp.ne.s32.totalorder %s40, %s41
      %p55 = scmp.eq.s32.totalorder %s19, 3
      %p56 = por %p54, %p55
      %p58 = scmp.ne.s32.totalorder %s41, %s57
      %p59 = scmp.eq.s32.totalorder %s19, 0
      %p60 = por %p58, %p59
      %s61 = ssub.s32 %s20, %s32
      %s62 = ssub.s32 %s21, %s28
      %s63 = sor.u32 %s61, %s62
      %p64 = scmp.eq.s32.totalorder %s63, 0
      %s66 = sadd.s32 %s65, 1
      %s67 = scalar_select %p64, %s65, %s66
      %p70 = pneg %p64
      %p71 = scmp.eq.s32.totalorder %s13, 3
      %p72 = por %p70, %p71
      %p73 = scmp.ne.s32.totalorder %s65, %s68
      %p74 = scmp.eq.s32.totalorder %s13, 0
      %p75 = por %p73, %p74
      %p76 = scmp.ne.s32.totalorder %s65, %s68
      %p77 = scmp.eq.s32.totalorder %s18, 3
      %p78 = por %p76, %p77
      %p79 = scmp.ne.s32.totalorder %s68, %s69
      %p80 = scmp.eq.s32.totalorder %s18, 0
      %p81 = por %p79, %p80
      %p82 = scmp.ne.s32.totalorder %s68, %s69
      %p83 = scmp.eq.s32.totalorder %s19, 3
      %p84 = por %p82, %p83
      %p86 = scmp.ne.s32.totalorder %s69, %s85
      %p87 = scmp.eq.s32.totalorder %s19, 0
      %p88 = por %p86, %p87
      %p89 = scmp.le.s32.totalorder 1, %s13
      %p90 = scmp.lt.s32.totalorder %s13, 5
      %p91 = pnand %p89, %p90
      %p92 = pneg %p91
      // Predicated region
      $region9: #{tpu_custom_call.1} parent=5 // pred_check
        _
      $region10: #{tpu_custom_call.1} parent=5 // pred_check_branch
        %94 = sbr.rel (%p91) target = $region12
      $region11: #{tpu_custom_call.1} parent=5 // pred_region
        %s95 = ssub.s32 %s13, 1
      $region12: #{tpu_custom_call.1} parent=5 // pred_fallthru
        _
      %p96 = scmp.lt.s32.totalorder %s13, 4
      // Predicated region
      $region13: #{tpu_custom_call.1} parent=5 // pred_check
        %p97 = pneg %p96
      $region14: #{tpu_custom_call.1} parent=5 // pred_check_branch
        %99 = sbr.rel (%p97) target = $region16
      $region15: #{tpu_custom_call.1} parent=5 // pred_region
        // Predicated region
        $region17: #{tpu_custom_call.1} parent=15 // pred_check
          %p100 = pneg %p47
        $region18: #{tpu_custom_call.1} parent=15 // pred_check_branch
          %102 = sbr.rel (%p100) target = $region20
        $region19: #{tpu_custom_call.1} parent=15 // pred_region
          %s103 = sand.u32 %s37, 1
          %s104 = scalar_lea.sflag [#allocation5], %s103
          %s105 = sand.u32 %s37, 1
          %s106 = smul.addr %s105, 32
          %s107 = scalar_lea.vmem [#allocation4], %s106
          %s108 = smul.u32 2, %s21
          %s110 = ssub.s32 512, 512
          %111 = vsyncadd %s104, %s110
          %s112 = smul.addr %s108, 2
          %s113 = smul.addr %s20, 8
          %s114 = sadd.s32 %s112, %s113
          %s115 = smul.addr %s114, 128
          %s116 = scalar_lea.hbm %s0, %s115
          %s117 = sshll.u32 %s107, 4
          %s118 = int_to_ptr.vmem [resolvable:$true] %s117
          %123 = dma.hbm_to_vmem [thread:$0]  %s116, 512, %s118, %s104, 128, 128, 8
        $region20: #{tpu_custom_call.1} parent=15 // pred_fallthru
          _
      $region16: #{tpu_custom_call.1} parent=5 // pred_fallthru
        _
      %p124 = scmp.le.s32.totalorder 1, %s13
      %p125 = scmp.lt.s32.totalorder %s13, 5
      %p126 = pnand %p124, %p125
      %p127 = pneg %p126
      // Predicated region
      $region21: #{tpu_custom_call.1} parent=5 // pred_check
        _
      $region22: #{tpu_custom_call.1} parent=5 // pred_check_branch
        %129 = sbr.rel (%p126) target = $region24
      $region23: #{tpu_custom_call.1} parent=5 // pred_region
        %s130 = ssub.s32 %s13, 1
        %s131 = sand.u32 %s40, 1
        %s132 = scalar_lea.sflag [#allocation5], %s131
        %s133 = sand.u32 %s40, 1
        %s134 = smul.addr %s133, 32
        %s135 = scalar_lea.vmem [#allocation4], %s134
        // Predicated region
        $region25: #{tpu_custom_call.1} parent=23 // pred_check
          %p136 = pneg %p53
        $region26: #{tpu_custom_call.1} parent=23 // pred_check_branch
          %138 = sbr.rel (%p136) target = $region28
        $region27: #{tpu_custom_call.1} parent=23 // pred_region
          %139 = dma.done %s132, 512
        $region28: #{tpu_custom_call.1} parent=23 // pred_fallthru
          _
        %s140 = sand.u32 %s40, 1
        %s141 = scalar_lea.sflag [#allocation5], %s140
        %s142 = sand.u32 %s40, 1
        %s143 = smul.addr %s142, 32
        %s144 = scalar_lea.vmem [#allocation4], %s143
        %p145 = pneg %p53
        %p146 = pneg %p50
        %p147 = pneg %p81
        %p148 = pneg %p78
        %s149 = sand.u32 %s68, 1
        %s150 = scalar_lea.sflag [#allocation6], %s149
        %s151 = sand.u32 %s68, 1
        %s152 = smul.addr %s151, 32
        %s153 = scalar_lea.vmem [#allocation7], %s152
        %s154 = smul.u32 2, %s23
        %s155 = smul.u32 2, %s23
        %vm156 = vcmask 156672
        %157 = vst.msk [vmem:[#allocation2] sm:$0x3] %vm156, 0.0
        %158 = vst.msk [vmem:[#allocation2 + $0x18] sm:$0x3] %vm156, 0.0
        %159 = vst.msk [vmem:[#allocation2 + $0x12] sm:$0x3] %vm156, 0.0
        %160 = vst.msk [vmem:[#allocation2 + $0x2a] sm:$0x3] %vm156, 0.0
        %vm161 = vcmask 15360
        %162 = vst.msk [vmem:[#allocation2 + $0x2] sm:$0xff] %vm161, 0.0
        %163 = vst.msk [vmem:[#allocation2 + $0xa] sm:$0xff] %vm161, 0.0
        %164 = vst.msk [vmem:[#allocation2 + $0x1a] sm:$0xff] %vm161, 0.0
        %165 = vst.msk [vmem:[#allocation2 + $0x22] sm:$0xff] %vm161, 0.0
        %vm166 = vcmask 162960
        %167 = vst.msk [vmem:[#allocation2 + $0x2] sm:$0xff] %vm166, 0.0
        %168 = vst.msk [vmem:[#allocation2 + $0xa] sm:$0xff] %vm166, 0.0
        %169 = vst.msk [vmem:[#allocation2 + $0x1a] sm:$0xff] %vm166, 0.0
        %170 = vst.msk [vmem:[#allocation2 + $0x22] sm:$0xff] %vm166, 0.0
        %v171 = vld [vmem:[%s135] sm:$0xff]
        %v172 = vld [vmem:[%s135 + $0x8] sm:$0xff]
        %v173 = vld [vmem:[%s135 + $0x10] sm:$0xff]
        %v174 = vld [vmem:[%s135 + $0x18] sm:$0xff]
        %179 = vrot.lane.b32.xlu0 %v171, 2
        %v180 = vpop.permute.xlu0 %179
        %181 = vrot.lane.b32.xlu0 %v172, 2
        %v182 = vpop.permute.xlu0 %181
        %183 = vrot.lane.b32.xlu0 %v173, 2
        %v184 = vpop.permute.xlu0 %183
        %185 = vrot.lane.b32.xlu0 %v174, 2
        %v186 = vpop.permute.xlu0 %185
        %vm191 = vcmask 146448
        %192 = vst.msk [vmem:[#allocation2 + $0x2] sm:$0xff] %vm191, %v180
        %193 = vst.msk [vmem:[#allocation2 + $0xa] sm:$0xff] %vm191, %v182
        %194 = vst.msk [vmem:[#allocation2 + $0x1a] sm:$0xff] %vm191, %v184
        %195 = vst.msk [vmem:[#allocation2 + $0x22] sm:$0xff] %vm191, %v186
        %v196 = vld [vmem:[#allocation2 + $0x2] sm:$0xff]
        %v197 = vld [vmem:[#allocation2 + $0xa] sm:$0xff]
        %v198 = vld [vmem:[#allocation2 + $0x1a] sm:$0xff]
        %v199 = vld [vmem:[#allocation2 + $0x22] sm:$0xff]
        %v200 = vmul.f32 %v196, 0.45186275
        %v201 = vmul.f32 %v197, 0.45186275
        %v202 = vmul.f32 %v198, 0.45186275
        %v203 = vmul.f32 %v199, 0.45186275
        %v204 = vld [vmem:[#allocation2 + $0x1] sm:$0xff]
        %v205 = vld [vmem:[#allocation2 + $0x9] sm:$0xff]
        %v206 = vld [vmem:[#allocation2 + $0x19] sm:$0xff]
        %v207 = vld [vmem:[#allocation2 + $0x21] sm:$0xff]
        %v208 = vld [vmem:[#allocation2 + $0x3] sm:$0xff]
        %v209 = vld [vmem:[#allocation2 + $0xb] sm:$0xff]
        %v210 = vld [vmem:[#allocation2 + $0x1b] sm:$0xff]
        %v211 = vld [vmem:[#allocation2 + $0x23] sm:$0xff]
        %v212 = vadd.f32 %v204, %v208
        %v213 = vadd.f32 %v205, %v209
        %v214 = vadd.f32 %v206, %v210
        %v215 = vadd.f32 %v207, %v211
        %v216 = vmul.f32 %v212, 0.27406862
        %v217 = vmul.f32 %v213, 0.27406862
        %v218 = vmul.f32 %v214, 0.27406862
        %v219 = vmul.f32 %v215, 0.27406862
        %v220 = vadd.f32 %v200, %v216
        %v221 = vadd.f32 %v201, %v217
        %v222 = vadd.f32 %v202, %v218
        %v223 = vadd.f32 %v203, %v219
        %vm224 = vcmask 162816
        %225 = vst.msk [vmem:[#allocation3] sm:$0xff] %vm224, %v220
        %226 = vst.msk [vmem:[#allocation3 + $0x8] sm:$0xff] %vm224, %v221
        %227 = vst.msk [vmem:[#allocation3 + $0x10] sm:$0xff] %vm224, %v222
        %228 = vst.msk [vmem:[#allocation3 + $0x18] sm:$0xff] %vm224, %v223
        %v229 = vld [vmem:[#allocation3] sm:$0xff]
        %v230 = vld [vmem:[#allocation3 + $0x8] sm:$0xff]
        %v231 = vld [vmem:[#allocation3 + $0x10] sm:$0xff]
        %v232 = vld [vmem:[#allocation3 + $0x18] sm:$0xff]
        %v233 = vmul.f32 %v229, 0.22593138
        %v234 = vmul.f32 %v230, 0.22593138
        %v235 = vmul.f32 %v231, 0.22593138
        %v236 = vmul.f32 %v232, 0.22593138
        %241 = vrot.lane.b32.xlu0 %v229, 126
        %v242 = vpop.permute.xlu0 %241
        %243 = vrot.lane.b32.xlu0 %v230, 126
        %v244 = vpop.permute.xlu0 %243
        %245 = vrot.lane.b32.xlu0 %v231, 126
        %v246 = vpop.permute.xlu0 %245
        %247 = vrot.lane.b32.xlu0 %v232, 126
        %v248 = vpop.permute.xlu0 %247
        %v253 = vadd.f32 %v229, %v242
        %v254 = vadd.f32 %v230, %v244
        %v255 = vadd.f32 %v231, %v246
        %v256 = vadd.f32 %v232, %v248
        %v257 = vmul.f32 %v253, 0.13703431
        %v258 = vmul.f32 %v254, 0.13703431
        %v259 = vmul.f32 %v255, 0.13703431
        %v260 = vmul.f32 %v256, 0.13703431
        %265 = vrot.lane.b32.xlu0 %v257, 1
        %v266 = vpop.permute.xlu0 %265
        %267 = vrot.lane.b32.xlu0 %v258, 1
        %v268 = vpop.permute.xlu0 %267
        %269 = vrot.lane.b32.xlu0 %v259, 1
        %v270 = vpop.permute.xlu0 %269
        %271 = vrot.lane.b32.xlu0 %v260, 1
        %v272 = vpop.permute.xlu0 %271
        %v277 = vadd.f32 %v233, %v266
        %v278 = vadd.f32 %v234, %v268
        %v279 = vadd.f32 %v235, %v270
        %v280 = vadd.f32 %v236, %v272
        %v281 = vld [vmem:[#allocation2 + $0x2] sm:$0xff]
        %v282 = vld [vmem:[#allocation2 + $0xa] sm:$0xff]
        %v283 = vld [vmem:[#allocation2 + $0x1a] sm:$0xff]
        %v284 = vld [vmem:[#allocation2 + $0x22] sm:$0xff]
        %v285 = vmul.f32 %v281, 0.25137913
        %v286 = vmul.f32 %v282, 0.25137913
        %v287 = vmul.f32 %v283, 0.25137913
        %v288 = vmul.f32 %v284, 0.25137913
        %v289 = vld [vmem:[#allocation2] sm:$0xff]
        %v290 = vld [vmem:[#allocation2 + $0x8] sm:$0xff]
        %v291 = vld [vmem:[#allocation2 + $0x18] sm:$0xff]
        %v292 = vld [vmem:[#allocation2 + $0x20] sm:$0xff]
        %v293 = vld [vmem:[#allocation2 + $0x4] sm:$0xff]
        %v294 = vld [vmem:[#allocation2 + $0xc] sm:$0xff]
        %v295 = vld [vmem:[#allocation2 + $0x1c] sm:$0xff]
        %v296 = vld [vmem:[#allocation2 + $0x24] sm:$0xff]
        %v297 = vadd.f32 %v289, %v293
        %v298 = vadd.f32 %v290, %v294
        %v299 = vadd.f32 %v291, %v295
        %v300 = vadd.f32 %v292, %v296
        %v301 = vmul.f32 %v297, 0.15246914
        %v302 = vmul.f32 %v298, 0.15246914
        %v303 = vmul.f32 %v299, 0.15246914
        %v304 = vmul.f32 %v300, 0.15246914
        %v305 = vadd.f32 %v285, %v301
        %v306 = vadd.f32 %v286, %v302
        %v307 = vadd.f32 %v287, %v303
        %v308 = vadd.f32 %v288, %v304
        %v309 = vld [vmem:[#allocation2 + $0x1] sm:$0xff]
        %v310 = vld [vmem:[#allocation2 + $0x9] sm:$0xff]
        %v311 = vld [vmem:[#allocation2 + $0x19] sm:$0xff]
        %v312 = vld [vmem:[#allocation2 + $0x21] sm:$0xff]
        %v313 = vld [vmem:[#allocation2 + $0x3] sm:$0xff]
        %v314 = vld [vmem:[#allocation2 + $0xb] sm:$0xff]
        %v315 = vld [vmem:[#allocation2 + $0x1b] sm:$0xff]
        %v316 = vld [vmem:[#allocation2 + $0x23] sm:$0xff]
        %v317 = vadd.f32 %v309, %v313
        %v318 = vadd.f32 %v310, %v314
        %v319 = vadd.f32 %v311, %v315
        %v320 = vadd.f32 %v312, %v316
        %v321 = vmul.f32 %v317, 0.22184129
        %v322 = vmul.f32 %v318, 0.22184129
        %v323 = vmul.f32 %v319, 0.22184129
        %v324 = vmul.f32 %v320, 0.22184129
        %v325 = vadd.f32 %v305, %v321
        %v326 = vadd.f32 %v306, %v322
        %v327 = vadd.f32 %v307, %v323
        %v328 = vadd.f32 %v308, %v324
        %329 = vst.msk [vmem:[#allocation3] sm:$0xff] %vm224, %v325
        %330 = vst.msk [vmem:[#allocation3 + $0x8] sm:$0xff] %vm224, %v326
        %331 = vst.msk [vmem:[#allocation3 + $0x10] sm:$0xff] %vm224, %v327
        %332 = vst.msk [vmem:[#allocation3 + $0x18] sm:$0xff] %vm224, %v328
        %v333 = vld [vmem:[#allocation3] sm:$0xff]
        %v334 = vld [vmem:[#allocation3 + $0x8] sm:$0xff]
        %v335 = vld [vmem:[#allocation3 + $0x10] sm:$0xff]
        %v336 = vld [vmem:[#allocation3 + $0x18] sm:$0xff]
        %v337 = vmul.f32 %v333, 0.12568957
        %v338 = vmul.f32 %v334, 0.12568957
        %v339 = vmul.f32 %v335, 0.12568957
        %v340 = vmul.f32 %v336, 0.12568957
        %v341 = vadd.f32 %v277, %v337
        %v342 = vadd.f32 %v278, %v338
        %v343 = vadd.f32 %v279, %v339
        %v344 = vadd.f32 %v280, %v340
        %349 = vrot.lane.b32.xlu0 %v333, 124
        %v350 = vpop.permute.xlu0 %349
        %351 = vrot.lane.b32.xlu0 %v334, 124
        %v352 = vpop.permute.xlu0 %351
        %353 = vrot.lane.b32.xlu0 %v335, 124
        %v354 = vpop.permute.xlu0 %353
        %355 = vrot.lane.b32.xlu0 %v336, 124
        %v356 = vpop.permute.xlu0 %355
        %v361 = vadd.f32 %v333, %v350
        %v362 = vadd.f32 %v334, %v352
        %v363 = vadd.f32 %v335, %v354
        %v364 = vadd.f32 %v336, %v356
        %v365 = vmul.f32 %v361, 0.07623457
        %v366 = vmul.f32 %v362, 0.07623457
        %v367 = vmul.f32 %v363, 0.07623457
        %v368 = vmul.f32 %v364, 0.07623457
        %373 = vrot.lane.b32.xlu0 %v365, 2
        %v374 = vpop.permute.xlu0 %373
        %375 = vrot.lane.b32.xlu0 %v366, 2
        %v376 = vpop.permute.xlu0 %375
        %377 = vrot.lane.b32.xlu0 %v367, 2
        %v378 = vpop.permute.xlu0 %377
        %379 = vrot.lane.b32.xlu0 %v368, 2
        %v380 = vpop.permute.xlu0 %379
        %v385 = vadd.f32 %v341, %v374
        %v386 = vadd.f32 %v342, %v376
        %v387 = vadd.f32 %v343, %v378
        %v388 = vadd.f32 %v344, %v380
        %389 = vrot.lane.b32.xlu0 %v333, 126
        %v390 = vpop.permute.xlu0 %389
        %391 = vrot.lane.b32.xlu0 %v334, 126
        %v392 = vpop.permute.xlu0 %391
        %393 = vrot.lane.b32.xlu0 %v335, 126
        %v394 = vpop.permute.xlu0 %393
        %395 = vrot.lane.b32.xlu0 %v336, 126
        %v396 = vpop.permute.xlu0 %395
        %v401 = vadd.f32 %v333, %v390
        %v402 = vadd.f32 %v334, %v392
        %v403 = vadd.f32 %v335, %v394
        %v404 = vadd.f32 %v336, %v396
        %v405 = vmul.f32 %v401, 0.110920645
        %v406 = vmul.f32 %v402, 0.110920645
        %v407 = vmul.f32 %v403, 0.110920645
        %v408 = vmul.f32 %v404, 0.110920645
        %413 = vrot.lane.b32.xlu0 %v405, 1
        %v414 = vpop.permute.xlu0 %413
        %415 = vrot.lane.b32.xlu0 %v406, 1
        %v416 = vpop.permute.xlu0 %415
        %417 = vrot.lane.b32.xlu0 %v407, 1
        %v418 = vpop.permute.xlu0 %417
        %419 = vrot.lane.b32.xlu0 %v408, 1
        %v420 = vpop.permute.xlu0 %419
        %v425 = vadd.f32 %v385, %v414
        %v426 = vadd.f32 %v386, %v416
        %v427 = vadd.f32 %v387, %v418
        %v428 = vadd.f32 %v388, %v420
        %433 = vrot.lane.b32.xlu0 %v425, 126
        %v434 = vpop.permute.xlu0 %433
        %435 = vrot.lane.b32.xlu0 %v426, 126
        %v436 = vpop.permute.xlu0 %435
        %437 = vrot.lane.b32.xlu0 %v427, 126
        %v438 = vpop.permute.xlu0 %437
        %439 = vrot.lane.b32.xlu0 %v428, 126
        %v440 = vpop.permute.xlu0 %439
        %vm445 = vcmask 130048
        %446 = vst.msk [vmem:[%s153] sm:$0xff] %vm445, %v434
        %447 = vst.msk [vmem:[%s153 + $0x8] sm:$0xff] %vm445, %v436
        %448 = vst.msk [vmem:[%s153 + $0x10] sm:$0xff] %vm445, %v438
        %449 = vst.msk [vmem:[%s153 + $0x18] sm:$0xff] %vm445, %v440
        %s450 = sand.u32 %s68, 1
        %s451 = scalar_lea.sflag [#allocation6], %s450
        %s452 = sand.u32 %s68, 1
        %s453 = smul.addr %s452, 32
        %s454 = scalar_lea.vmem [#allocation7], %s453
        // Predicated region
        $region29: #{tpu_custom_call.1} parent=23 // pred_check
          %p455 = pneg %p78
        $region30: #{tpu_custom_call.1} parent=23 // pred_check_branch
          %457 = sbr.rel (%p455) target = $region32
        $region31: #{tpu_custom_call.1} parent=23 // pred_region
          %s458 = smul.u32 2, %s23
          %s460 = ssub.s32 512, 512
          %461 = vsyncadd %s451, %s460
          %s462 = smul.addr %s458, 2
          %s463 = smul.addr %s22, 8
          %s464 = sadd.s32 %s462, %s463
          %s465 = smul.addr %s464, 128
          %s466 = scalar_lea.hbm %s1, %s465
          %s467 = sshll.u32 %s454, 4
          %s468 = int_to_ptr.vmem [resolvable:$true] %s467
          %473 = dma.vmem_to_hbm [thread:$0]  %s468, 512, %s466, %s451, 128, 128, 8
        $region32: #{tpu_custom_call.1} parent=23 // pred_fallthru
          _
      $region24: #{tpu_custom_call.1} parent=5 // pred_fallthru
        _
      %p474 = scmp.le.s32.totalorder 2, %s13
      // Predicated region
      $region33: #{tpu_custom_call.1} parent=5 // pred_check
        %p475 = pneg %p474
      $region34: #{tpu_custom_call.1} parent=5 // pred_check_branch
        %477 = sbr.rel (%p475) target = $region36
      $region35: #{tpu_custom_call.1} parent=5 // pred_region
        %s478 = ssub.s32 %s13, 2
        // Predicated region
        $region37: #{tpu_custom_call.1} parent=35 // pred_check
          %p479 = pneg %p84
        $region38: #{tpu_custom_call.1} parent=35 // pred_check_branch
          %481 = sbr.rel (%p479) target = $region40
        $region39: #{tpu_custom_call.1} parent=35 // pred_region
          %s482 = sand.u32 %s69, 1
          %s483 = scalar_lea.sflag [#allocation6], %s482
          %s484 = sand.u32 %s69, 1
          %s485 = smul.addr %s484, 32
          %s486 = scalar_lea.vmem [#allocation7], %s485
          %487 = dma.done %s483, 512
        $region40: #{tpu_custom_call.1} parent=35 // pred_fallthru
          _
      $region36: #{tpu_custom_call.1} parent=5 // pred_fallthru
        _
    $region6: #{tpu_custom_call.1} parent=1 // loop_footer
      %s17 = sadd.s32 1, %s13
    $region7: #{tpu_custom_call.1} parent=1 // loop_footer_branch
      %12 = sbr.rel target = $region3
    $region8: #{tpu_custom_call.1} parent=1 // loop_exit
      _
    %488 = vsyncpa [#allocation5], 1
    %s489 = scalar_lea.sflag [#allocation5], 1
    %490 = vsyncpa %s489, 1
    %491 = vsyncpa [#allocation6], 1
    %s492 = scalar_lea.sflag [#allocation6], 1
    %493 = vsyncpa %s492, 1

</llo_original>
